<compile_context>
chip_gen: v7x
topology: tpu7x:2x2x1
jax: 0.10.0
libtpu: 0.0.40
codegen_flags: <defaults>
</compile_context>

<pallas_src>
import math

import jax
import jax.numpy as jnp
from jax.experimental import pallas as pl
from jax.experimental.pallas import tpu as pltpu

# Small problem sizes consistent with a BERT-style config.
B, S, H = 2, 8, 32
NUM_HEADS = 4
HEAD_DIM = H // NUM_HEADS


def self_attention_kernel(x_ref, wqkv_ref, bqkv_ref, hmask_ref, wp_ref, bp_ref,
                          out_ref):
    """Whole problem in one invocation; everything lives in VMEM."""
    f32 = jnp.float32
    scale = 1.0 / math.sqrt(HEAD_DIM)

    # Fused Q|K|V projection: ONE MXU matmul over all batches/tokens.
    x2d = x_ref[...].reshape(B * S, H)                                    # [16, 32]
    qkv = jnp.dot(x2d, wqkv_ref[...], preferred_element_type=f32) + bqkv_ref[...]
    qkv = qkv.reshape(B, S, 3 * H)                                        # [2, 8, 96]

    q0 = qkv[:, 0:1, 0:H] * scale                                         # [B, 1, H] (token-0 query)
    k = qkv[:, :, H:2 * H]                                                # [B, S, H]
    v = qkv[:, :, 2 * H:3 * H]                                            # [B, S, H]

    # Lane-expanded per-head scores: scores[b, s, j] = <q0_head(j), k_head(j)>.
    # hmask[i, j] = 1 iff i, j belong to the same head (block-diagonal of ones), so a
    # single [B*S, H] @ [H, H] matmul computes every head's dot product at once —
    # no per-head lane slices, no concatenate.
    prod = (q0 * k).reshape(B * S, H)                                     # [16, 32]
    scores = jnp.dot(prod, hmask_ref[...],
                     preferred_element_type=f32).reshape(B, S, H)
    # attention_mask == 0.0 in the module's forward -> nothing to add.

    # Numerically stable softmax over the key axis (axis=1), per (batch, head).
    m = jnp.max(scores, axis=1, keepdims=True)                            # [B, 1, H]
    e = jnp.exp(scores - m)
    p = e * pl.reciprocal(jnp.sum(e, axis=1, keepdims=True))              # exact 1/x
    # dropout(probs) with eval/deterministic semantics == identity.

    # Context of token 0; heads are already contiguous along lanes.
    ctx = jnp.sum(p * v, axis=1)                                          # [B, H]

    # torch.tanh(context) then BertPooler: dense(H, H) + tanh. Single [B, H] store.
    pooled = jnp.tanh(
        jnp.dot(jnp.tanh(ctx), wp_ref[...], preferred_element_type=f32) + bp_ref[...])
    out_ref[...] = pooled.astype(out_ref.dtype)


@jax.jit
def self_attention_pooler(x, wq, bq, wk, bk, wv, bv, wp, bp):
    """x: [B, S, H] float32 -> out: [B, H] float32."""
    wqkv = jnp.concatenate([wq, wk, wv], axis=1)          # [H, 3H]
    bqkv = jnp.concatenate([bq, bk, bv], axis=1)          # [1, 3H]
    head_id = jnp.arange(H, dtype=jnp.int32) // HEAD_DIM
    hmask = (head_id[:, None] == head_id[None, :]).astype(jnp.float32)   # [H, H]

    vmem = pltpu.MemorySpace.VMEM
    return pl.pallas_call(
        self_attention_kernel,
        out_shape=jax.ShapeDtypeStruct((B, H), jnp.float32),
        in_specs=[pl.BlockSpec(memory_space=vmem) for _ in range(6)],
        out_specs=pl.BlockSpec(memory_space=vmem),
    )(x, wqkv, bqkv, hmask, wp, bp)


def reference(x, wq, bq, wk, bk, wv, bv, wp, bp):
    """Pure-JAX reference mirroring the PyTorch module (full attention, then token 0)."""
    q = x @ wq + bq
    k = x @ wk + bk
    v = x @ wv + bv

    def split_heads(t):  # [B, S, H] -> [B, nh, S, dh]
        return t.reshape(B, S, NUM_HEADS, HEAD_DIM).transpose(0, 2, 1, 3)

    qh, kh, vh = split_heads(q), split_heads(k), split_heads(v)
    scores = jnp.einsum("bhqd,bhkd->bhqk", qh, kh) / math.sqrt(HEAD_DIM)
    scores = scores + 0.0  # attention_mask == 0.0
    probs = jax.nn.softmax(scores, axis=-1)
    ctx = jnp.einsum("bhqk,bhkd->bhqd", probs, vh)
    ctx = ctx.transpose(0, 2, 1, 3).reshape(B, S, H)
    first = jnp.tanh(ctx)[:, 0, :]
    return jnp.tanh(first @ wp + bp)


if __name__ == "__main__":
    key = jax.random.PRNGKey(0)
    ks = jax.random.split(key, 9)
    x = jax.random.normal(ks[0], (B, S, H), dtype=jnp.float32)

    def init_w(k):
        return 0.02 * jax.random.normal(k, (H, H), dtype=jnp.float32)

    def init_b(k):
        return 0.02 * jax.random.normal(k, (1, H), dtype=jnp.float32)

    wq, bq = init_w(ks[1]), init_b(ks[2])
    wk, bk = init_w(ks[3]), init_b(ks[4])
    wv, bv = init_w(ks[5]), init_b(ks[6])
    wp, bp = init_w(ks[7]), init_b(ks[8])

    out = self_attention_pooler(x, wq, bq, wk, bk, wv, bv, wp, bp)
    out = jax.block_until_ready(out)
    assert out.shape == (B, H)

    # Reference uses XLA's default TPU matmul precision while the kernel computes the
    # attention inner products exactly in f32 on the VPU, so allow a small (bf16-pass
    # sized) tolerance; any real wiring bug produces errors orders of magnitude larger.
    ref = reference(x, wq, bq, wk, bk, wv, bv, wp, bp)
    max_err = jnp.max(jnp.abs(out - ref))
    assert jnp.allclose(out, ref, atol=5e-4, rtol=5e-4), f"max abs err {max_err}"

    print("KERNEL_OK")
</pallas_src>

<mosaic_0001>
module attributes {stable_mosaic.version = 11 : i64} {
  func.func @self_attention_kernel(%arg0: memref<2x8x32xf32, #tpu.memory_space<vmem>>, %arg1: memref<32x96xf32, #tpu.memory_space<vmem>>, %arg2: memref<1x96xf32, #tpu.memory_space<vmem>>, %arg3: memref<32x32xf32, #tpu.memory_space<vmem>>, %arg4: memref<32x32xf32, #tpu.memory_space<vmem>>, %arg5: memref<1x32xf32, #tpu.memory_space<vmem>>, %arg6: memref<2x32xf32, #tpu.memory_space<vmem>>) attributes {dimension_semantics = [], scalar_prefetch = 0 : i64, scratch_operands = 0 : i64, tpu.core_type = #tpu.core_type<tc>} {
    %c0 = arith.constant 0 : index
    %c0_0 = arith.constant 0 : index
    %c0_1 = arith.constant 0 : index
    %0 = vector.load %arg0[%c0, %c0_0, %c0_1] : memref<2x8x32xf32, #tpu.memory_space<vmem>>, vector<2x8x32xf32>
    %1 = vector.shape_cast %0 : vector<2x8x32xf32> to vector<16x32xf32>
    %c0_2 = arith.constant 0 : index
    %c0_3 = arith.constant 0 : index
    %2 = vector.load %arg1[%c0_2, %c0_3] : memref<32x96xf32, #tpu.memory_space<vmem>>, vector<32x96xf32>
    %cst = arith.constant dense<0.000000e+00> : vector<16x96xf32>
    %3 = tpu.matmul %1, %2, %cst {dimension_numbers = #tpu.dot_dimension_numbers<[1], [0], [0], [1], [0, 0, 1, 1], [], []>} : vector<16x32xf32>, vector<32x96xf32>, vector<16x96xf32> -> vector<16x96xf32>
    %c0_4 = arith.constant 0 : index
    %c0_5 = arith.constant 0 : index
    %4 = vector.load %arg2[%c0_4, %c0_5] : memref<1x96xf32, #tpu.memory_space<vmem>>, vector<1x96xf32>
    %5 = vector.broadcast %4 : vector<1x96xf32> to vector<16x96xf32>
    %6 = arith.addf %3, %5 : vector<16x96xf32>
    %7 = vector.shape_cast %6 : vector<16x96xf32> to vector<2x8x96xf32>
    %8 = vector.extract_strided_slice %7 {offsets = [0, 0, 0], sizes = [2, 1, 32], strides = [1, 1, 1]} : vector<2x8x96xf32> to vector<2x1x32xf32>
    %cst_6 = arith.constant 0.353553385 : f32
    %9 = vector.broadcast %cst_6 : f32 to vector<2x1x32xf32>
    %10 = arith.mulf %8, %9 : vector<2x1x32xf32>
    %11 = vector.extract_strided_slice %7 {offsets = [0, 0, 32], sizes = [2, 8, 32], strides = [1, 1, 1]} : vector<2x8x96xf32> to vector<2x8x32xf32>
    %12 = vector.extract_strided_slice %7 {offsets = [0, 0, 64], sizes = [2, 8, 32], strides = [1, 1, 1]} : vector<2x8x96xf32> to vector<2x8x32xf32>
    %13 = vector.broadcast %10 : vector<2x1x32xf32> to vector<2x8x32xf32>
    %14 = arith.mulf %13, %11 : vector<2x8x32xf32>
    %15 = vector.shape_cast %14 : vector<2x8x32xf32> to vector<16x32xf32>
    %c0_7 = arith.constant 0 : index
    %c0_8 = arith.constant 0 : index
    %16 = vector.load %arg3[%c0_7, %c0_8] : memref<32x32xf32, #tpu.memory_space<vmem>>, vector<32x32xf32>
    %cst_9 = arith.constant dense<0.000000e+00> : vector<16x32xf32>
    %17 = tpu.matmul %15, %16, %cst_9 {dimension_numbers = #tpu.dot_dimension_numbers<[1], [0], [0], [1], [0, 0, 1, 1], [], []>} : vector<16x32xf32>, vector<32x32xf32>, vector<16x32xf32> -> vector<16x32xf32>
    %18 = vector.shape_cast %17 : vector<16x32xf32> to vector<2x8x32xf32>
    %cst_10 = arith.constant dense<0xFF800000> : vector<2x32xf32>
    %19 = vector.multi_reduction <maximumf>, %18, %cst_10 [1] : vector<2x8x32xf32> to vector<2x32xf32>
    %20 = vector.shape_cast %19 : vector<2x32xf32> to vector<2x1x32xf32>
    %21 = vector.broadcast %20 : vector<2x1x32xf32> to vector<2x8x32xf32>
    %22 = arith.subf %18, %21 : vector<2x8x32xf32>
    %23 = math.exp %22 : vector<2x8x32xf32>
    %cst_11 = arith.constant dense<0.000000e+00> : vector<2x32xf32>
    %24 = vector.multi_reduction <add>, %23, %cst_11 [1] : vector<2x8x32xf32> to vector<2x32xf32>
    %25 = vector.shape_cast %24 : vector<2x32xf32> to vector<2x1x32xf32>
    %26 = tpu.reciprocal %25 : vector<2x1x32xf32> -> vector<2x1x32xf32>
    %27 = vector.broadcast %26 : vector<2x1x32xf32> to vector<2x8x32xf32>
    %28 = arith.mulf %23, %27 : vector<2x8x32xf32>
    %29 = arith.mulf %28, %12 : vector<2x8x32xf32>
    %cst_12 = arith.constant dense<0.000000e+00> : vector<2x32xf32>
    %30 = vector.multi_reduction <add>, %29, %cst_12 [1] : vector<2x8x32xf32> to vector<2x32xf32>
    %31 = math.tanh %30 : vector<2x32xf32>
    %c0_13 = arith.constant 0 : index
    %c0_14 = arith.constant 0 : index
    %32 = vector.load %arg4[%c0_13, %c0_14] : memref<32x32xf32, #tpu.memory_space<vmem>>, vector<32x32xf32>
    %cst_15 = arith.constant dense<0.000000e+00> : vector<2x32xf32>
    %33 = tpu.matmul %31, %32, %cst_15 {dimension_numbers = #tpu.dot_dimension_numbers<[1], [0], [0], [1], [0, 0, 1, 1], [], []>} : vector<2x32xf32>, vector<32x32xf32>, vector<2x32xf32> -> vector<2x32xf32>
    %c0_16 = arith.constant 0 : index
    %c0_17 = arith.constant 0 : index
    %34 = vector.load %arg5[%c0_16, %c0_17] : memref<1x32xf32, #tpu.memory_space<vmem>>, vector<1x32xf32>
    %35 = vector.broadcast %34 : vector<1x32xf32> to vector<2x32xf32>
    %36 = arith.addf %33, %35 : vector<2x32xf32>
    %37 = math.tanh %36 : vector<2x32xf32>
    %c0_18 = arith.constant 0 : index
    %c0_19 = arith.constant 0 : index
    %38 = vector.load %arg6[%c0_18, %c0_19] : memref<2x32xf32, #tpu.memory_space<vmem>>, vector<2x32xf32>
    tpu.vector_store %arg6[%c0_18, %c0_19], %37 {strides = array<i32>} : memref<2x32xf32, #tpu.memory_space<vmem>>, vector<2x32xf32>,
    return
  }
}

</mosaic_0001>

<llo_original>
// kernel: self_attention_pooler.1
$region0: #{self_attention_pooler.1}
  #allocation0 [shape = 'u32[]', space=smem, size = 0x4, offset = 0x4, fixed_abs, tag = 'smem constant byte address 0x4 - core index']
  #allocation1 [shape = 'u32[144,128]{1,0:T(1,128)}', space=vmem, size = 0x12000, scoped, tag = 'internal scratch']
  %s0 = inlined_call_operand.vmem [shape: f32[2,8,32], index: 0, kind: input, shape index: {}]
  %s1 = inlined_call_operand.vmem [shape: f32[32,96], index: 1, kind: input, shape index: {}]
  %s2 = inlined_call_operand.vmem [shape: f32[1,96], index: 2, kind: input, shape index: {}]
  %s3 = inlined_call_operand.vmem [shape: f32[32,32], index: 3, kind: input, shape index: {}]
  %s4 = inlined_call_operand.vmem [shape: f32[32,32], index: 4, kind: input, shape index: {}]
  %s5 = inlined_call_operand.vmem [shape: f32[1,32], index: 5, kind: input, shape index: {}]
  %s6 = inlined_call_operand.hbm [shape: f32[2,32], index: 6, kind: output, shape index: {}]
  %s7 = sld [smem:[#allocation0]]
  $region34: #{self_attention_pooler.1} parent=0
    _
  %s9 = ssub.s32 1, %s7
  %s10 = scalar_select 0, %s9, %s7
  $region1: #{self_attention_pooler.1} parent=0
    #allocation2 [shape = 'u8[1024]{0}', space=vmem, size = 0x400, scoped, tag = 'output window, operand 0, single buffered']
    #allocation3 [shape = 's32[1]{0}', space=sflag, size = 0x4, scoped, tag = 'scoped memory for self_attention_pooler.1']
    %11 = vsyncpa [#allocation3], 0
    // Predicated region
    $region2: #{self_attention_pooler.1} parent=1 // pred_check
      _
    $region3: #{self_attention_pooler.1} parent=1 // pred_check_branch
      %13 = sbr.rel (0) target = $region5
    $region4: #{self_attention_pooler.1} parent=1 // pred_region
      _
    $region5: #{self_attention_pooler.1} parent=1 // pred_fallthru
      _
    // Predicated region
    $region6: #{self_attention_pooler.1} parent=1 // pred_check
      _
    $region7: #{self_attention_pooler.1} parent=1 // pred_check_branch
      %15 = sbr.rel (0) target = $region9
    $region8: #{self_attention_pooler.1} parent=1 // pred_region
      _
    $region9: #{self_attention_pooler.1} parent=1 // pred_fallthru
      _
    // Predicated region
    $region10: #{self_attention_pooler.1} parent=1 // pred_check
      _
    $region11: #{self_attention_pooler.1} parent=1 // pred_check_branch
      %17 = sbr.rel (0) target = $region13
    $region12: #{self_attention_pooler.1} parent=1 // pred_region
      _
    $region13: #{self_attention_pooler.1} parent=1 // pred_fallthru
      _
    // Predicated region
    $region14: #{self_attention_pooler.1} parent=1 // pred_check
      _
    $region15: #{self_attention_pooler.1} parent=1 // pred_check_branch
      %19 = sbr.rel (0) target = $region17
    $region16: #{self_attention_pooler.1} parent=1 // pred_region
      _
    $region17: #{self_attention_pooler.1} parent=1 // pred_fallthru
      _
    // Predicated region
    $region18: #{self_attention_pooler.1} parent=1 // pred_check
      _
    $region19: #{self_attention_pooler.1} parent=1 // pred_check_branch
      %21 = sbr.rel (0) target = $region21
    $region20: #{self_attention_pooler.1} parent=1 // pred_region
      _
    $region21: #{self_attention_pooler.1} parent=1 // pred_fallthru
      _
    // Predicated region
    $region22: #{self_attention_pooler.1} parent=1 // pred_check
      _
    $region23: #{self_attention_pooler.1} parent=1 // pred_check_branch
      %23 = sbr.rel (0) target = $region25
    $region24: #{self_attention_pooler.1} parent=1 // pred_region
      _
    $region25: #{self_attention_pooler.1} parent=1 // pred_fallthru
      _
    %v24 = vld [vmem:[%s0] sm:$0xff]
    %v25 = vld [vmem:[%s0 + $0x8] sm:$0xff]
    %v26 = vld [vmem:[%s1] sm:$0xff]
    %v27 = vld [vmem:[%s1 + $0x8] sm:$0xff]
    %v28 = vld [vmem:[%s1 + $0x10] sm:$0xff]
    %v29 = vld [vmem:[%s1 + $0x18] sm:$0xff]
    %v30 = vld [vmem:[%s2] sm:$0x1]
    %v32 = vlaneseq
    %v33 = vshrl.u32 %v32, 7
    %v34 = vsub.s32 0, %v33
    %v35 = vrot.slane %v30, %v34
    %vm37 = vcmask 261120
    %v39 = vsel %vm37, %v24, 0
    %v42 = vsel %vm37, %v25, 0
    %44 = vmatprep.subr.mxu0 0.0
    %45 = vmatpush1.msra.mxu0 %v26
    %46 = vmatprep.subr.mxu0 0.0
    %47 = vmatpush1.msra.mxu0 %v27
    %48 = vmatprep.subr.mxu0 0.0
    %49 = vmatpush1.msra.mxu0 %v28
    %50 = vmatprep.subr.mxu0 0.0
    %51 = vmatpush1.msra.mxu0 %v29
    %52 = vmatprep.subr.mxu0 0.0
    %53 = vmatpush1.msra.mxu0 0.0
    %54 = vmatprep.subr.mxu0 0.0
    %55 = vmatpush1.msra.mxu0 0.0
    %56 = vmatprep.subr.mxu0 0.0
    %57 = vmatpush1.msra.mxu0 0.0
    %58 = vmatprep.subr.mxu0 0.0
    %59 = vmatpush1.msra.mxu0 0.0
    %60 = vmatprep.subr.mxu0 0.0
    %61 = vmatpush1.msra.mxu0 0.0
    %62 = vmatprep.subr.mxu0 0.0
    %63 = vmatpush1.msra.mxu0 0.0
    %64 = vmatprep.subr.mxu0 0.0
    %65 = vmatpush1.msra.mxu0 0.0
    %66 = vmatprep.subr.mxu0 0.0
    %67 = vmatpush1.msra.mxu0 0.0
    %68 = vmatprep.subr.mxu0 0.0
    %69 = vmatpush1.msra.mxu0 0.0
    %70 = vmatprep.subr.mxu0 0.0
    %71 = vmatpush1.msra.mxu0 0.0
    %72 = vmatprep.subr.mxu0 0.0
    %73 = vmatpush1.msra.mxu0 0.0
    %74 = vmatprep.subr.mxu0 0.0
    %75 = vmatpush1.msra.mxu0 0.0
    %76 = vmatprep.subr.mxu0 0.0
    %77 = vmatpush1.msra.mxu0 0.0
    %78 = vmatprep.subr.mxu0 0.0
    %79 = vmatpush1.msra.mxu0 0.0
    %80 = vmatprep.subr.mxu0 0.0
    %81 = vmatpush1.msra.mxu0 0.0
    %82 = vmatprep.subr.mxu0 0.0
    %83 = vmatpush1.msra.mxu0 0.0
    %84 = vmatprep.subr.mxu0 0.0
    %85 = vmatpush1.msra.mxu0 0.0
    %86 = vmatprep.subr.mxu0 0.0
    %87 = vmatpush1.msra.mxu0 0.0
    %88 = vmatprep.subr.mxu0 0.0
    %89 = vmatpush1.msra.mxu0 0.0
    %90 = vmatprep.subr.mxu0 0.0
    %91 = vmatpush1.msra.mxu0 0.0
    %92 = vmatprep.subr.mxu0 0.0
    %93 = vmatpush1.msra.mxu0 0.0
    %94 = vmatprep.subr.mxu0 0.0
    %95 = vmatpush1.msra.mxu0 0.0
    %96 = vmatprep.subr.mxu0 0.0
    %97 = vmatpush1.msra.mxu0 0.0
    %98 = vmatprep.subr.mxu0 0.0
    %99 = vmatpush1.msra.mxu0 0.0
    %100 = vmatprep.subr.mxu0 0.0
    %101 = vmatpush1.msra.mxu0 0.0
    %102 = vmatprep.subr.mxu0 0.0
    %103 = vmatpush1.msra.mxu0 0.0
    %104 = vmatprep.subr.mxu0 0.0
    %105 = vmatpush1.msra.mxu0 0.0
    %106 = vmatprep.subr.mxu0 0.0
    %107 = vmatpush1.msra.mxu0 0.0
    %108 = vmatprep.mubr.f32.mxu0 0.0
    %109 = vmatmul.mubr.f32.gmra.mrb[0].mxu0 %v39
    %v110 = vpop.f32.mrb[0].mxu0
    %v111 = vadd.f32 %v35, %v110
    %v112 = vpop.f32.mrb[0].mxu0
    %113 = vmatprep.mubr.f32.mxu0 0.0
    %114 = vmatmul.mubr.f32.gmra.mrb[0].mxu0 %v42
    %v115 = vpop.f32.mrb[0].mxu0
    %v116 = vadd.f32 %v35, %v115
    %v117 = vpop.f32.mrb[0].mxu0
    %118 = vdwg.mxu0
    %v119 = vmul.f32 %v111, 0.35355338
    %v120 = vmul.f32 %v116, 0.35355338
    %v121 = vlaneseq
    %v122 = vshrl.u32 %v121, 7
    %v123 = vsub.s32 0, %v122
    %v124 = vrot.slane %v119, %v123
    %v125 = vlaneseq
    %v126 = vshrl.u32 %v125, 7
    %v127 = vsub.s32 0, %v126
    %v128 = vrot.slane %v120, %v127
    %131 = vrot.lane.b32.xlu0 %v111, 96
    %v132 = vpop.permute.xlu0 %131
    %133 = vrot.lane.b32.xlu0 %v116, 96
    %v134 = vpop.permute.xlu0 %133
    %v137 = vmul.f32 %v124, %v132
    %v138 = vmul.f32 %v128, %v134
    %v139 = vld [vmem:[%s3] sm:$0xff]
    %v140 = vld [vmem:[%s3 + $0x8] sm:$0xff]
    %v141 = vld [vmem:[%s3 + $0x10] sm:$0xff]
    %v142 = vld [vmem:[%s3 + $0x18] sm:$0xff]
    %v144 = vsel %vm37, %v137, 0
    %v147 = vsel %vm37, %v138, 0
    %149 = vmatprep.subr.mxu0 0.0
    %150 = vmatpush1.msra.mxu0 %v139
    %151 = vmatprep.subr.mxu0 0.0
    %152 = vmatpush1.msra.mxu0 %v140
    %153 = vmatprep.subr.mxu0 0.0
    %154 = vmatpush1.msra.mxu0 %v141
    %155 = vmatprep.subr.mxu0 0.0
    %156 = vmatpush1.msra.mxu0 %v142
    %157 = vmatprep.subr.mxu0 0.0
    %158 = vmatpush1.msra.mxu0 0.0
    %159 = vmatprep.subr.mxu0 0.0
    %160 = vmatpush1.msra.mxu0 0.0
    %161 = vmatprep.subr.mxu0 0.0
    %162 = vmatpush1.msra.mxu0 0.0
    %163 = vmatprep.subr.mxu0 0.0
    %164 = vmatpush1.msra.mxu0 0.0
    %165 = vmatprep.subr.mxu0 0.0
    %166 = vmatpush1.msra.mxu0 0.0
    %167 = vmatprep.subr.mxu0 0.0
    %168 = vmatpush1.msra.mxu0 0.0
    %169 = vmatprep.subr.mxu0 0.0
    %170 = vmatpush1.msra.mxu0 0.0
    %171 = vmatprep.subr.mxu0 0.0
    %172 = vmatpush1.msra.mxu0 0.0
    %173 = vmatprep.subr.mxu0 0.0
    %174 = vmatpush1.msra.mxu0 0.0
    %175 = vmatprep.subr.mxu0 0.0
    %176 = vmatpush1.msra.mxu0 0.0
    %177 = vmatprep.subr.mxu0 0.0
    %178 = vmatpush1.msra.mxu0 0.0
    %179 = vmatprep.subr.mxu0 0.0
    %180 = vmatpush1.msra.mxu0 0.0
    %181 = vmatprep.subr.mxu0 0.0
    %182 = vmatpush1.msra.mxu0 0.0
    %183 = vmatprep.subr.mxu0 0.0
    %184 = vmatpush1.msra.mxu0 0.0
    %185 = vmatprep.subr.mxu0 0.0
    %186 = vmatpush1.msra.mxu0 0.0
    %187 = vmatprep.subr.mxu0 0.0
    %188 = vmatpush1.msra.mxu0 0.0
    %189 = vmatprep.subr.mxu0 0.0
    %190 = vmatpush1.msra.mxu0 0.0
    %191 = vmatprep.subr.mxu0 0.0
    %192 = vmatpush1.msra.mxu0 0.0
    %193 = vmatprep.subr.mxu0 0.0
    %194 = vmatpush1.msra.mxu0 0.0
    %195 = vmatprep.subr.mxu0 0.0
    %196 = vmatpush1.msra.mxu0 0.0
    %197 = vmatprep.subr.mxu0 0.0
    %198 = vmatpush1.msra.mxu0 0.0
    %199 = vmatprep.subr.mxu0 0.0
    %200 = vmatpush1.msra.mxu0 0.0
    %201 = vmatprep.subr.mxu0 0.0
    %202 = vmatpush1.msra.mxu0 0.0
    %203 = vmatprep.subr.mxu0 0.0
    %204 = vmatpush1.msra.mxu0 0.0
    %205 = vmatprep.subr.mxu0 0.0
    %206 = vmatpush1.msra.mxu0 0.0
    %207 = vmatprep.subr.mxu0 0.0
    %208 = vmatpush1.msra.mxu0 0.0
    %209 = vmatprep.subr.mxu0 0.0
    %210 = vmatpush1.msra.mxu0 0.0
    %211 = vmatprep.subr.mxu0 0.0
    %212 = vmatpush1.msra.mxu0 0.0
    %213 = vmatprep.mubr.f32.mxu0 0.0
    %214 = vmatmul.mubr.f32.gmra.mrb[0].mxu0 %v144
    %v215 = vpop.f32.mrb[0].mxu0
    %v216 = vadd.f32 0.0, %v215
    %v217 = vpop.f32.mrb[0].mxu0
    %218 = vmatprep.mubr.f32.mxu0 0.0
    %219 = vmatmul.mubr.f32.gmra.mrb[0].mxu0 %v147
    %v220 = vpop.f32.mrb[0].mxu0
    %v221 = vadd.f32 0.0, %v220
    %v222 = vpop.f32.mrb[0].mxu0
    %223 = vdwg.mxu0
    %v224 = vsel %vm37, %v216, -inf
    %v225 = vrot.slane %v224, 4
    %v226 = vmax.f32 %v224, %v225
    %v227 = vrot.slane %v226, 2
    %v228 = vmax.f32 %v226, %v227
    %v229 = vrot.slane %v228, 1
    %v230 = vmax.f32 %v228, %v229
    %v231 = vsel %vm37, %v221, -inf
    %v232 = vrot.slane %v231, 4
    %v233 = vmax.f32 %v231, %v232
    %v234 = vrot.slane %v233, 2
    %v235 = vmax.f32 %v233, %v234
    %v236 = vrot.slane %v235, 1
    %v237 = vmax.f32 %v235, %v236
    %v238 = vsub.f32 %v216, %v230
    %v239 = vsub.f32 %v221, %v237
    %v240 = vmul.f32 %v238, 1.442695
    %v241 = vpow.pop %v240
    %v242 = vmul.f32 %v239, 1.442695
    %v243 = vpow.pop %v242
    %v244 = vsel %vm37, %v241, 0.0
    %v245 = vrot.slane %v244, 4
    %v246 = vadd.f32 %v244, %v245
    %v247 = vrot.slane %v246, 2
    %v248 = vadd.f32 %v246, %v247
    %v249 = vrot.slane %v248, 1
    %v250 = vadd.f32 %v248, %v249
    %v251 = vsel %vm37, %v243, 0.0
    %v252 = vrot.slane %v251, 4
    %v253 = vadd.f32 %v251, %v252
    %v254 = vrot.slane %v253, 2
    %v255 = vadd.f32 %v253, %v254
    %v256 = vrot.slane %v255, 1
    %v257 = vadd.f32 %v255, %v256
    %v258 = vrcp.pop %v250
    %v259 = vrcp.pop %v257
    %v260 = vmul.f32 %v241, %v258
    %v261 = vmul.f32 %v243, %v259
    %262 = vrot.lane.b32.xlu0 %v111, 64
    %v263 = vpop.permute.xlu0 %262
    %264 = vrot.lane.b32.xlu0 %v116, 64
    %v265 = vpop.permute.xlu0 %264
    %v268 = vmul.f32 %v260, %v263
    %v269 = vmul.f32 %v261, %v265
    %v270 = vsel %vm37, %v268, 0.0
    %v271 = vrot.slane %v270, 4
    %v272 = vadd.f32 %v270, %v271
    %v273 = vrot.slane %v272, 2
    %v274 = vadd.f32 %v272, %v273
    %v275 = vrot.slane %v274, 1
    %v276 = vadd.f32 %v274, %v275
    %v277 = vsel %vm37, %v269, 0.0
    %v278 = vrot.slane %v277, 4
    %v279 = vadd.f32 %v277, %v278
    %v280 = vrot.slane %v279, 2
    %v281 = vadd.f32 %v279, %v280
    %v282 = vrot.slane %v281, 1
    %v283 = vadd.f32 %v281, %v282
    %v284 = vtanh.pop %v276
    %v285 = vtanh.pop %v283
    %v286 = vld [vmem:[%s4] sm:$0xff]
    %v287 = vld [vmem:[%s4 + $0x8] sm:$0xff]
    %v288 = vld [vmem:[%s4 + $0x10] sm:$0xff]
    %v289 = vld [vmem:[%s4 + $0x18] sm:$0xff]
    %v290 = vld [vmem:[%s5] sm:$0x1]
    %v292 = vlaneseq
    %v293 = vshrl.u32 %v292, 7
    %v294 = vsub.s32 0, %v293
    %v295 = vrot.slane %v290, %v294
    %vm299 = vcmask 1041409
    %v300 = vsel %vm299, %v285, %v284
    %v301 = vsel %vm37, %v300, 0
    %303 = vmatprep.subr.mxu0 0.0
    %304 = vmatpush1.msra.mxu0 %v286
    %305 = vmatprep.subr.mxu0 0.0
    %306 = vmatpush1.msra.mxu0 %v287
    %307 = vmatprep.subr.mxu0 0.0
    %308 = vmatpush1.msra.mxu0 %v288
    %309 = vmatprep.subr.mxu0 0.0
    %310 = vmatpush1.msra.mxu0 %v289
    %311 = vmatprep.subr.mxu0 0.0
    %312 = vmatpush1.msra.mxu0 0.0
    %313 = vmatprep.subr.mxu0 0.0
    %314 = vmatpush1.msra.mxu0 0.0
    %315 = vmatprep.subr.mxu0 0.0
    %316 = vmatpush1.msra.mxu0 0.0
    %317 = vmatprep.subr.mxu0 0.0
    %318 = vmatpush1.msra.mxu0 0.0
    %319 = vmatprep.subr.mxu0 0.0
    %320 = vmatpush1.msra.mxu0 0.0
    %321 = vmatprep.subr.mxu0 0.0
    %322 = vmatpush1.msra.mxu0 0.0
    %323 = vmatprep.subr.mxu0 0.0
    %324 = vmatpush1.msra.mxu0 0.0
    %325 = vmatprep.subr.mxu0 0.0
    %326 = vmatpush1.msra.mxu0 0.0
    %327 = vmatprep.subr.mxu0 0.0
    %328 = vmatpush1.msra.mxu0 0.0
    %329 = vmatprep.subr.mxu0 0.0
    %330 = vmatpush1.msra.mxu0 0.0
    %331 = vmatprep.subr.mxu0 0.0
    %332 = vmatpush1.msra.mxu0 0.0
    %333 = vmatprep.subr.mxu0 0.0
    %334 = vmatpush1.msra.mxu0 0.0
    %335 = vmatprep.subr.mxu0 0.0
    %336 = vmatpush1.msra.mxu0 0.0
    %337 = vmatprep.subr.mxu0 0.0
    %338 = vmatpush1.msra.mxu0 0.0
    %339 = vmatprep.subr.mxu0 0.0
    %340 = vmatpush1.msra.mxu0 0.0
    %341 = vmatprep.subr.mxu0 0.0
    %342 = vmatpush1.msra.mxu0 0.0
    %343 = vmatprep.subr.mxu0 0.0
    %344 = vmatpush1.msra.mxu0 0.0
    %345 = vmatprep.subr.mxu0 0.0
    %346 = vmatpush1.msra.mxu0 0.0
    %347 = vmatprep.subr.mxu0 0.0
    %348 = vmatpush1.msra.mxu0 0.0
    %349 = vmatprep.subr.mxu0 0.0
    %350 = vmatpush1.msra.mxu0 0.0
    %351 = vmatprep.subr.mxu0 0.0
    %352 = vmatpush1.msra.mxu0 0.0
    %353 = vmatprep.subr.mxu0 0.0
    %354 = vmatpush1.msra.mxu0 0.0
    %355 = vmatprep.subr.mxu0 0.0
    %356 = vmatpush1.msra.mxu0 0.0
    %357 = vmatprep.subr.mxu0 0.0
    %358 = vmatpush1.msra.mxu0 0.0
    %359 = vmatprep.subr.mxu0 0.0
    %360 = vmatpush1.msra.mxu0 0.0
    %361 = vmatprep.subr.mxu0 0.0
    %362 = vmatpush1.msra.mxu0 0.0
    %363 = vmatprep.subr.mxu0 0.0
    %364 = vmatpush1.msra.mxu0 0.0
    %365 = vmatprep.subr.mxu0 0.0
    %366 = vmatpush1.msra.mxu0 0.0
    %367 = vmatprep.mubr.f32.mxu0 0.0
    %368 = vmatmul.mubr.f32.gmra.mrb[0].mxu0 %v301
    %v369 = vpop.f32.mrb[0].mxu0
    %v370 = vadd.f32 %v295, %v369
    %v371 = vpop.f32.mrb[0].mxu0
    %372 = vdwg.mxu0
    %v373 = vtanh.pop %v370
    %vm374 = vcmask 254976
    %375 = vst.msk [vmem:[#allocation2] sm:$0x3] %vm374, %v373
    // Predicated region
    $region26: #{self_attention_pooler.1} parent=1 // pred_check
      _
    $region27: #{self_attention_pooler.1} parent=1 // pred_check_branch
      %377 = sbr.rel (0) target = $region29
    $region28: #{self_attention_pooler.1} parent=1 // pred_region
      %s379 = ssub.s32 32, 32
      %380 = vsyncadd [#allocation3], %s379
      %s382 = sshll.u32 [#allocation2], 4
      %s383 = int_to_ptr.vmem [resolvable:$true] %s382
      %385 = dma.vmem_to_hbm [thread:$0]  %s383, 32, %s6, [#allocation3]
    $region29: #{self_attention_pooler.1} parent=1 // pred_fallthru
      _
    // Predicated region
    $region30: #{self_attention_pooler.1} parent=1 // pred_check
      _
    $region31: #{self_attention_pooler.1} parent=1 // pred_check_branch
      %387 = sbr.rel (0) target = $region33
    $region32: #{self_attention_pooler.1} parent=1 // pred_region
      %388 = dma.done [#allocation3], 32
    $region33: #{self_attention_pooler.1} parent=1 // pred_fallthru
      _
    %389 = vsyncpa [#allocation3], 1

</llo_original>
